<compile_context>
chip_gen: v7x
topology: tpu7x:2x2x1
jax: 0.10.0
libtpu: 0.0.40
codegen_flags: <defaults>
</compile_context>

<pallas_src>
import functools

import jax
import jax.numpy as jnp
from jax.experimental import pallas as pl
from jax.experimental.pallas import tpu as pltpu


def _round_up(x, m):
    return ((x + m - 1) // m) * m


def _pow_gamma(one_minus_p, gamma):
    # gamma is a static Python float -> specialize at trace time.
    if gamma == 0.0:
        return jnp.ones_like(one_minus_p)
    if gamma == 1.0:
        return one_minus_p
    if gamma == 2.0:
        return one_minus_p * one_minus_p
    return jnp.power(one_minus_p, jnp.float32(gamma))


def _focal_kernel_classes_on_sublanes(logits_ref, targets_ref, alpha_ref,
                                      loss_ref, *, gamma):
    """Small-C layout. logits (C, TN), targets (1, TN), alpha (C, 1)."""
    logits = logits_ref[...].astype(jnp.float32)          # (C, TN)
    targets = targets_ref[...]                            # (1, TN) int32
    alpha = alpha_ref[...].astype(jnp.float32)            # (C, 1)

    class_ids = jax.lax.broadcasted_iota(jnp.int32, logits.shape, 0)   # (C, TN)
    class_mask = (class_ids == targets).astype(jnp.float32)           # (C, TN)

    # Fused log-softmax over the class axis (axis 0 in this layout).
    m = jnp.max(logits, axis=0, keepdims=True)             # (1, TN)
    e = jnp.exp(logits - m)
    denom = jnp.sum(e, axis=0, keepdims=True)              # (1, TN)
    logit_t = jnp.sum(logits * class_mask, axis=0, keepdims=True)      # (1, TN)
    log_p = logit_t - m - jnp.log(denom)                   # log P[target]
    probs = jnp.exp(log_p)                                 # P[target]
    a = jnp.sum(alpha * class_mask, axis=0, keepdims=True)  # alpha[target]

    loss_ref[...] = -a * _pow_gamma(1.0 - probs, gamma) * log_p        # (1, TN)


def _focal_kernel_classes_on_lanes(logits_ref, targets_ref, alpha_ref,
                                   loss_ref, *, gamma):
    """Large-C layout. logits (TN, C), targets (TN, 1), alpha (1, C)."""
    logits = logits_ref[...].astype(jnp.float32)          # (TN, C)
    targets = targets_ref[...]                            # (TN, 1) int32
    alpha = alpha_ref[...].astype(jnp.float32)            # (1, C)

    class_ids = jax.lax.broadcasted_iota(jnp.int32, logits.shape, 1)   # (TN, C)
    class_mask = (class_ids == targets).astype(jnp.float32)           # (TN, C)

    m = jnp.max(logits, axis=1, keepdims=True)             # (TN, 1)
    e = jnp.exp(logits - m)
    denom = jnp.sum(e, axis=1, keepdims=True)              # (TN, 1)
    logit_t = jnp.sum(logits * class_mask, axis=1, keepdims=True)      # (TN, 1)
    log_p = logit_t - m - jnp.log(denom)
    probs = jnp.exp(log_p)
    a = jnp.sum(alpha * class_mask, axis=1, keepdims=True)

    loss_ref[...] = -a * _pow_gamma(1.0 - probs, gamma) * log_p        # (TN, 1)


def focal_loss(logits, targets, alpha, *, gamma=2.0, size_average=True):
    """Pallas implementation of FocalLoss.forward.

    logits:  (N, C) float (any float dtype; cast to f32 inside the kernel)
    targets: (N,)   int class indices in [0, C)
    alpha:   (C, 1) per-class weights (ones by default in the module)
    Returns a scalar float32 loss.
    """
    N, C = logits.shape
    itemsize = jnp.dtype(logits.dtype).itemsize
    # Per-logits-tile byte budget; Pallas double-buffers, so live VMEM for the
    # logits stream is ~2x this. Chosen to fit v7x's 64 MiB physical VMEM with
    # plenty of headroom.
    budget = 4 * 1024 * 1024

    transposed = C < 128  # small class count -> put the batch on lanes

    if transposed:
        tile = min(2048, max(128, (budget // (C * itemsize)) // 128 * 128))
        tile = min(tile, _round_up(N, 128))
        n_pad = _round_up(N, tile)
        grid = (n_pad // tile,)
        # Zero padding is benign: padded rows get finite losses and are
        # sliced off before the reduction.
        logits_in = jnp.pad(logits, ((0, n_pad - N), (0, 0))).T          # (C, n_pad)
        targets_in = jnp.pad(targets.astype(jnp.int32),
                             (0, n_pad - N)).reshape(1, n_pad)
        alpha_in = alpha.reshape(C, 1).astype(jnp.float32)
        kernel = functools.partial(_focal_kernel_classes_on_sublanes,
                                   gamma=float(gamma))
        in_specs = [
            pl.BlockSpec((C, tile), lambda i: (0, i)),   # logits tile
            pl.BlockSpec((1, tile), lambda i: (0, i)),   # targets tile
            pl.BlockSpec((C, 1), lambda i: (0, 0)),      # alpha (resident)
        ]
        out_shape = jax.ShapeDtypeStruct((1, n_pad), jnp.float32)
        out_specs = pl.BlockSpec((1, tile), lambda i: (0, i))
    else:
        tile = min(1024, max(8, (budget // (C * itemsize)) // 8 * 8))
        tile = min(tile, _round_up(N, 8))
        n_pad = _round_up(N, tile)
        grid = (n_pad // tile,)
        logits_in = jnp.pad(logits, ((0, n_pad - N), (0, 0)))            # (n_pad, C)
        targets_in = jnp.pad(targets.astype(jnp.int32),
                             (0, n_pad - N)).reshape(n_pad, 1)
        alpha_in = alpha.reshape(1, C).astype(jnp.float32)
        kernel = functools.partial(_focal_kernel_classes_on_lanes,
                                   gamma=float(gamma))
        in_specs = [
            pl.BlockSpec((tile, C), lambda i: (i, 0)),   # logits tile
            pl.BlockSpec((tile, 1), lambda i: (i, 0)),   # targets tile
            pl.BlockSpec((1, C), lambda i: (0, 0)),      # alpha (resident)
        ]
        out_shape = jax.ShapeDtypeStruct((n_pad, 1), jnp.float32)
        out_specs = pl.BlockSpec((tile, 1), lambda i: (i, 0))

    cost = pl.CostEstimate(
        flops=8 * n_pad * C,
        transcendentals=n_pad * (C + 2),
        bytes_accessed=n_pad * C * itemsize + 8 * n_pad + 4 * C,
    )

    per_sample = pl.pallas_call(
        kernel,
        out_shape=out_shape,
        grid=grid,
        in_specs=in_specs,
        out_specs=out_specs,
        compiler_params=pltpu.CompilerParams(
            dimension_semantics=("parallel",),
            vmem_limit_bytes=32 * 1024 * 1024,
        ),
        cost_estimate=cost,
    )(logits_in, targets_in, alpha_in)

    losses = per_sample.reshape(-1)[:N]
    return jnp.mean(losses) if size_average else jnp.sum(losses)


def focal_loss_ref(logits, targets, alpha, *, gamma=2.0, size_average=True):
    """Pure-JAX reference matching the PyTorch module."""
    N, C = logits.shape
    P = jax.nn.softmax(logits.astype(jnp.float32), axis=1)
    class_mask = jax.nn.one_hot(targets, C, dtype=jnp.float32)
    probs = jnp.sum(P * class_mask, axis=1, keepdims=True)
    a = alpha.reshape(-1)[targets].reshape(-1, 1).astype(jnp.float32)
    log_p = jnp.log(probs)
    batch_loss = -a * jnp.power(1.0 - probs, gamma) * log_p
    return jnp.mean(batch_loss) if size_average else jnp.sum(batch_loss)


if __name__ == "__main__":
    # Small, deterministic example matching the module's expected input:
    # N=8 samples, C=4 classes, alpha=None -> ones(class_num, 1).
    N, C = 8, 4
    key = jax.random.PRNGKey(0)
    k_logits, k_targets = jax.random.split(key)
    logits = jax.random.normal(k_logits, (N, C), dtype=jnp.float32)
    targets = jax.random.randint(k_targets, (N,), 0, C, dtype=jnp.int32)
    alpha = jnp.ones((C, 1), dtype=jnp.float32)

    loss = focal_loss(logits, targets, alpha, gamma=2.0, size_average=True)
    loss = jax.block_until_ready(loss)
    ref = focal_loss_ref(logits, targets, alpha, gamma=2.0, size_average=True)
    assert jnp.allclose(loss, ref, rtol=1e-5, atol=1e-6), (loss, ref)

    # Also exercise the large-C (classes-on-lanes) layout path.
    N2, C2 = 64, 256
    k1, k2 = jax.random.split(jax.random.PRNGKey(1))
    logits2 = jax.random.normal(k1, (N2, C2), dtype=jnp.float32)
    targets2 = jax.random.randint(k2, (N2,), 0, C2, dtype=jnp.int32)
    alpha2 = jnp.ones((C2, 1), dtype=jnp.float32)
    loss2 = jax.block_until_ready(
        focal_loss(logits2, targets2, alpha2, gamma=2.0, size_average=True))
    ref2 = focal_loss_ref(logits2, targets2, alpha2, gamma=2.0,
                          size_average=True)
    assert jnp.allclose(loss2, ref2, rtol=1e-5, atol=1e-6), (loss2, ref2)

    print("KERNEL_OK")
</pallas_src>

<mosaic_0001>
module attributes {stable_mosaic.version = 11 : i64} {
  func.func @_focal_kernel_classes_on_sublanes(%arg0: i32, %arg1: memref<4x128xf32, #tpu.memory_space<vmem>>, %arg2: memref<1x128xi32, #tpu.memory_space<vmem>>, %arg3: memref<4x1xf32, #tpu.memory_space<vmem>>, %arg4: memref<1x128xf32, #tpu.memory_space<vmem>>) attributes {dimension_semantics = [#tpu.dimension_semantics<parallel>], iteration_bounds = array<i64: 1>, scalar_prefetch = 0 : i64, scratch_operands = 0 : i64, tpu.core_type = #tpu.core_type<tc>, window_params = [{transform_indices = @transform_0, window_bounds = array<i64: 4, 128>}, {transform_indices = @transform_1, window_bounds = array<i64: 1, 128>}, {pipeline_mode = #tpu.pipeline_mode<synchronous>, transform_indices = @transform_2, window_bounds = array<i64: 4, 1>}, {transform_indices = @transform_3, window_bounds = array<i64: 1, 128>}]} {
    %c0 = arith.constant 0 : index
    %c0_0 = arith.constant 0 : index
    %0 = vector.load %arg1[%c0, %c0_0] : memref<4x128xf32, #tpu.memory_space<vmem>>, vector<4x128xf32>
    %c0_1 = arith.constant 0 : index
    %c0_2 = arith.constant 0 : index
    %1 = vector.load %arg2[%c0_1, %c0_2] : memref<1x128xi32, #tpu.memory_space<vmem>>, vector<1x128xi32>
    %c0_3 = arith.constant 0 : index
    %c0_4 = arith.constant 0 : index
    %2 = vector.load %arg3[%c0_3, %c0_4] : memref<4x1xf32, #tpu.memory_space<vmem>>, vector<4x1xf32>
    %3 = tpu.iota {dimensions = array<i32: 0>} : vector<4x128xi32>
    %4 = vector.broadcast %1 : vector<1x128xi32> to vector<4x128xi32>
    %5 = arith.cmpi eq, %3, %4 : vector<4x128xi32>
    %6 = arith.extui %5 : vector<4x128xi1> to vector<4x128xi32>
    %7 = arith.sitofp %6 : vector<4x128xi32> to vector<4x128xf32>
    %cst = arith.constant dense<0xFF800000> : vector<128xf32>
    %8 = vector.multi_reduction <maximumf>, %0, %cst [0] : vector<4x128xf32> to vector<128xf32>
    %9 = vector.shape_cast %8 : vector<128xf32> to vector<1x128xf32>
    %10 = vector.broadcast %9 : vector<1x128xf32> to vector<4x128xf32>
    %11 = arith.subf %0, %10 : vector<4x128xf32>
    %12 = math.exp %11 : vector<4x128xf32>
    %cst_5 = arith.constant dense<0.000000e+00> : vector<128xf32>
    %13 = vector.multi_reduction <add>, %12, %cst_5 [0] : vector<4x128xf32> to vector<128xf32>
    %14 = vector.shape_cast %13 : vector<128xf32> to vector<1x128xf32>
    %15 = arith.mulf %0, %7 : vector<4x128xf32>
    %cst_6 = arith.constant dense<0.000000e+00> : vector<128xf32>
    %16 = vector.multi_reduction <add>, %15, %cst_6 [0] : vector<4x128xf32> to vector<128xf32>
    %17 = vector.shape_cast %16 : vector<128xf32> to vector<1x128xf32>
    %18 = arith.subf %17, %9 : vector<1x128xf32>
    %19 = math.log %14 : vector<1x128xf32>
    %20 = arith.subf %18, %19 : vector<1x128xf32>
    %21 = math.exp %20 : vector<1x128xf32>
    %22 = vector.broadcast %2 : vector<4x1xf32> to vector<4x128xf32>
    %23 = arith.mulf %22, %7 : vector<4x128xf32>
    %cst_7 = arith.constant dense<0.000000e+00> : vector<128xf32>
    %24 = vector.multi_reduction <add>, %23, %cst_7 [0] : vector<4x128xf32> to vector<128xf32>
    %25 = vector.shape_cast %24 : vector<128xf32> to vector<1x128xf32>
    %cst_8 = arith.constant 0.000000e+00 : f32
    %26 = vector.broadcast %cst_8 : f32 to vector<1x128xf32>
    %27 = arith.subf %26, %25 : vector<1x128xf32>
    %cst_9 = arith.constant 1.000000e+00 : f32
    %28 = vector.broadcast %cst_9 : f32 to vector<1x128xf32>
    %29 = arith.subf %28, %21 : vector<1x128xf32>
    %30 = arith.mulf %29, %29 : vector<1x128xf32>
    %31 = arith.mulf %27, %30 : vector<1x128xf32>
    %32 = arith.mulf %31, %20 : vector<1x128xf32>
    %c0_10 = arith.constant 0 : index
    %c0_11 = arith.constant 0 : index
    %33 = vector.load %arg4[%c0_10, %c0_11] : memref<1x128xf32, #tpu.memory_space<vmem>>, vector<1x128xf32>
    tpu.vector_store %arg4[%c0_10, %c0_11], %32 {strides = array<i32>} : memref<1x128xf32, #tpu.memory_space<vmem>>, vector<1x128xf32>,
    return
  }
  func.func @transform_0(%arg0: i32) -> (i32, i32) {
    %c0_i32 = arith.constant 0 : i32
    %c0_i32_0 = arith.constant 0 : i32
    return %c0_i32, %arg0 : i32, i32
  }
  func.func @transform_1(%arg0: i32) -> (i32, i32) {
    %c0_i32 = arith.constant 0 : i32
    %c0_i32_0 = arith.constant 0 : i32
    return %c0_i32, %arg0 : i32, i32
  }
  func.func @transform_2(%arg0: i32) -> (i32, i32) {
    %c0_i32 = arith.constant 0 : i32
    %c0_i32_0 = arith.constant 0 : i32
    %c0_i32_1 = arith.constant 0 : i32
    return %c0_i32, %c0_i32_0 : i32, i32
  }
  func.func @transform_3(%arg0: i32) -> (i32, i32) {
    %c0_i32 = arith.constant 0 : i32
    %c0_i32_0 = arith.constant 0 : i32
    return %c0_i32, %arg0 : i32, i32
  }
}

</mosaic_0001>

<llo_original>
// kernel: tpu_custom_call.1
$region0: #{tpu_custom_call.1}
  #allocation0 [shape = 'u32[]', space=smem, size = 0x4, offset = 0x4, fixed_abs, tag = 'smem constant byte address 0x4 - core index']
  #allocation1 [shape = 'u32[144,128]{1,0:T(1,128)}', space=vmem, size = 0x12000, scoped, tag = 'internal scratch']
  %s0 = inlined_call_operand.vmem [shape: f32[4,128], index: 0, kind: input, shape index: {}]
  %s1 = inlined_call_operand.vmem [shape: s32[1,128], index: 1, kind: input, shape index: {}]
  %s2 = inlined_call_operand.vmem [shape: f32[4,1], index: 2, kind: input, shape index: {}]
  %s3 = inlined_call_operand.hbm [shape: f32[1,128], index: 3, kind: output, shape index: {}]
  %s4 = sld [smem:[#allocation0]]
  $region22: #{tpu_custom_call.1} parent=0
    _
  %s6 = ssub.s32 1, %s4
  %s7 = scalar_select 0, %s6, %s4
  $region1: #{tpu_custom_call.1} parent=0
    #allocation2 [shape = 'u8[512]{0}', space=vmem, size = 0x400, scoped, tag = 'output window, operand 0, single buffered']
    #allocation3 [shape = 's32[1]{0}', space=sflag, size = 0x4, scoped, tag = 'scoped memory for tpu_custom_call.1']
    %8 = vsyncpa [#allocation3], 0
    // Predicated region
    $region2: #{tpu_custom_call.1} parent=1 // pred_check
      _
    $region3: #{tpu_custom_call.1} parent=1 // pred_check_branch
      %10 = sbr.rel (0) target = $region5
    $region4: #{tpu_custom_call.1} parent=1 // pred_region
      _
    $region5: #{tpu_custom_call.1} parent=1 // pred_fallthru
      _
    // Predicated region
    $region6: #{tpu_custom_call.1} parent=1 // pred_check
      _
    $region7: #{tpu_custom_call.1} parent=1 // pred_check_branch
      %12 = sbr.rel (0) target = $region9
    $region8: #{tpu_custom_call.1} parent=1 // pred_region
      _
    $region9: #{tpu_custom_call.1} parent=1 // pred_fallthru
      _
    // Predicated region
    $region10: #{tpu_custom_call.1} parent=1 // pred_check
      _
    $region11: #{tpu_custom_call.1} parent=1 // pred_check_branch
      %14 = sbr.rel (0) target = $region13
    $region12: #{tpu_custom_call.1} parent=1 // pred_region
      _
    $region13: #{tpu_custom_call.1} parent=1 // pred_fallthru
      _
    %v15 = vld [vmem:[%s0] sm:$0xf]
    %v16 = vld [vmem:[%s1] sm:$0x1]
    %v17 = vld [vmem:[%s2] sm:$0xf]
    %v18 = vlaneseq
    %v19 = vshrl.u32 %v18, 7
    %v20 = vlaneseq
    %v21 = vshrl.u32 %v20, 7
    %v22 = vsub.s32 0, %v21
    %v23 = vrot.slane %v16, %v22
    %vm24 = vcmp.eq.s32.totalorder %v19, %v23
    %v25 = vsel %vm24, 1, 0
    %v26 = vcvt.s32.f32 %v25
    %vm27 = vcmask 1043456
    %v28 = vsel %vm27, %v15, -inf
    %v29 = vrot.slane %v28, 4
    %v30 = vmax.f32 %v28, %v29
    %v31 = vrot.slane %v30, 2
    %v32 = vmax.f32 %v30, %v31
    %v33 = vrot.slane %v32, 1
    %v34 = vmax.f32 %v32, %v33
    %v35 = vsub.f32 %v15, %v34
    %v36 = vmul.f32 %v35, 1.442695
    %v37 = vpow.pop %v36
    %v38 = vsel %vm27, %v37, 0.0
    %v39 = vrot.slane %v38, 4
    %v40 = vadd.f32 %v38, %v39
    %v41 = vrot.slane %v40, 2
    %v42 = vadd.f32 %v40, %v41
    %v43 = vrot.slane %v42, 1
    %v44 = vadd.f32 %v42, %v43
    %v45 = vmul.f32 %v15, %v26
    %v46 = vsel %vm27, %v45, 0.0
    %v47 = vrot.slane %v46, 4
    %v48 = vadd.f32 %v46, %v47
    %v49 = vrot.slane %v48, 2
    %v50 = vadd.f32 %v48, %v49
    %v51 = vrot.slane %v50, 1
    %v52 = vadd.f32 %v50, %v51
    %v53 = vsub.f32 %v52, %v34
    %v54 = vlog2.pop %v44
    %v55 = vmul.f32 %v54, 0.6931472
    %v56 = vsub.f32 %v53, %v55
    %v57 = vmul.f32 %v56, 1.442695
    %v58 = vpow.pop %v57
    %60 = vset.pattern.permute.xlu0 0
    %61 = vperm.xlu0 %60, %v17
    %v62 = vpop.permute.xlu0 %61
    %v64 = vmul.f32 %v62, %v26
    %v65 = vsel %vm27, %v64, 0.0
    %v66 = vrot.slane %v65, 4
    %v67 = vadd.f32 %v65, %v66
    %v68 = vrot.slane %v67, 2
    %v69 = vadd.f32 %v67, %v68
    %v70 = vrot.slane %v69, 1
    %v71 = vadd.f32 %v69, %v70
    %v72 = vsub.f32 0.0, %v71
    %v73 = vsub.f32 1.0, %v58
    %v74 = vmul.f32 %v73, %v73
    %v75 = vmul.f32 %v72, %v74
    %v76 = vmul.f32 %v75, %v56
    %77 = vst [vmem:[#allocation2] sm:$0x1] %v76
    // Predicated region
    $region14: #{tpu_custom_call.1} parent=1 // pred_check
      _
    $region15: #{tpu_custom_call.1} parent=1 // pred_check_branch
      %79 = sbr.rel (0) target = $region17
    $region16: #{tpu_custom_call.1} parent=1 // pred_region
      %s81 = ssub.s32 16, 16
      %82 = vsyncadd [#allocation3], %s81
      %s84 = sshll.u32 [#allocation2], 4
      %s85 = int_to_ptr.vmem [resolvable:$true] %s84
      %87 = dma.vmem_to_hbm [thread:$0]  %s85, 16, %s3, [#allocation3]
    $region17: #{tpu_custom_call.1} parent=1 // pred_fallthru
      _
    // Predicated region
    $region18: #{tpu_custom_call.1} parent=1 // pred_check
      _
    $region19: #{tpu_custom_call.1} parent=1 // pred_check_branch
      %89 = sbr.rel (0) target = $region21
    $region20: #{tpu_custom_call.1} parent=1 // pred_region
      %90 = dma.done [#allocation3], 16
    $region21: #{tpu_custom_call.1} parent=1 // pred_fallthru
      _
    %91 = vsyncpa [#allocation3], 1

</llo_original>
